<compile_context>
chip_gen: v5e
topology: v5e:2x2
jax: 0.10.0
libtpu: 0.0.40
codegen_flags: <defaults>
</compile_context>

<pallas_src>
import jax
import jax.numpy as jnp
from jax.experimental import pallas as pl
from jax.experimental.pallas import tpu as pltpu

OUT_CLASSES = 13     # real number of classes
HIDDEN = 16          # classifier hidden width
OUT_PAD = 128        # lane-dense padded output width
TB_MAX = 2048        # max batch tile (per-step x2 f32 tile = 8 MiB)


def _combined_kernel(
    x1_ref,    # (TB, TEXT_DIM)  f32   text input tile
    x2_ref,    # (TB, IMG_DIM)   f32   flattened image input tile
    wt_ref,    # (TEXT_DIM, 16)  f32   fused text path weight  (wt @ W1_text)
    wi_ref,    # (IMG_DIM, 16)   bf16  fused image path weight (wi @ W1_img)
    b1_ref,    # (1, 16)         f32   fused bias (bt@W1_t + bi@W1_i + b1)
    w2_ref,    # (16, 128)       f32   Linear2 weight, zero-padded past col 13
    b2_ref,    # (1, 128)        f32   Linear2 bias, -1e30 past col 13
    out_ref,   # (TB, 128)       bf16  softmax probabilities (padded lanes = 0)
):
    # In-kernel bf16 cast of the dominant stream (hidden under DMA); the
    # matmul accumulates in f32.
    x2 = x2_ref[...].astype(jnp.bfloat16)

    # h = ReLU(cat(text(x1), image(x2)) @ W1 + b1), exactly fused.
    h = (jnp.dot(x1_ref[...], wt_ref[...], preferred_element_type=jnp.float32)
         + jnp.dot(x2, wi_ref[...], preferred_element_type=jnp.float32)
         + b1_ref[...])
    h = jnp.maximum(h, 0.0)

    logits = jnp.dot(h, w2_ref[...],
                     preferred_element_type=jnp.float32) + b2_ref[...]

    # Softmax over dim=1.  Padding lanes hold -1e30 -> exp underflows to 0,
    # so the 128-lane reduction equals the 13-class softmax exactly.
    m = jnp.max(logits, axis=-1, keepdims=True)
    e = jnp.exp(logits - m)
    denom = jnp.sum(e, axis=-1, keepdims=True)
    inv = 1.0 / denom            # exact reciprocal on a (TB,1) array: ~free
    out_ref[...] = (e * inv).astype(out_ref.dtype)


def _round_up(x, m):
    return (x + m - 1) // m * m


def combined_model_forward(x1, x2_nchw, params):
    """x1: (B, TEXT_DIM) f32; x2_nchw: (B, C, H, W) f32. Returns (B, 13) f32."""
    B, text_dim = x1.shape
    x2 = x2_nchw.reshape(B, -1)          # free bitcast-reshape; NO dtype pre-pass
    img_dim = x2.shape[1]

    # --- exact algebraic fusion of sub-models + concat + classifier Linear1 ---
    wt_f = (params["wt"] @ params["w1a"]).astype(jnp.float32)        # (TEXT_DIM, 16)
    wi_f = (params["wi"] @ params["w1b"]).astype(jnp.bfloat16)       # (IMG_DIM, 16)
    b1_f = (params["bt"] @ params["w1a"]
            + params["bi"] @ params["w1b"]
            + params["b1"]).astype(jnp.float32)                      # (1, 16)

    # --- lane-dense padded Linear2 (128 output lanes, valid = first 13) ---
    w2_pad = jnp.zeros((HIDDEN, OUT_PAD), jnp.float32).at[:, :OUT_CLASSES].set(
        params["w2"])
    b2_pad = jnp.full((1, OUT_PAD), -1e30, jnp.float32).at[:, :OUT_CLASSES].set(
        params["b2"])

    # Batch tile: big enough to amortize per-step overhead, small enough that
    # the grid keeps >=4 steps (2 steps per TensorCore on v7x megacore),
    # rounded to a multiple of 16 for bf16 sublane alignment.
    TB = min(TB_MAX, _round_up(max(pl.cdiv(B, 4), 1), 16))
    grid = (pl.cdiv(B, TB),)

    def row_spec(feat):
        return pl.BlockSpec((TB, feat), lambda i: (i, 0))

    def const_spec(shape):
        return pl.BlockSpec(shape, lambda i: (0, 0))

    bytes_accessed = (x1.size * 4 + x2.size * 4            # streamed inputs (f32)
                      + wt_f.size * 4 + wi_f.size * 2
                      + b1_f.size * 4 + w2_pad.size * 4 + b2_pad.size * 4
                      + B * OUT_PAD * 2)                    # bf16 output slab
    flops = 2 * B * (text_dim * HIDDEN + img_dim * HIDDEN + HIDDEN * OUT_PAD)
    cost = pl.CostEstimate(flops=flops,
                           transcendentals=B * OUT_PAD,
                           bytes_accessed=bytes_accessed)

    out_padded = pl.pallas_call(
        _combined_kernel,
        out_shape=jax.ShapeDtypeStruct((B, OUT_PAD), jnp.bfloat16),
        grid_spec=pltpu.PrefetchScalarGridSpec(
            num_scalar_prefetch=0,
            grid=grid,
            in_specs=[
                row_spec(text_dim),          # x1
                row_spec(img_dim),           # x2
                const_spec(wt_f.shape),      # fused text weight
                const_spec(wi_f.shape),      # fused image weight
                const_spec(b1_f.shape),      # fused bias
                const_spec(w2_pad.shape),    # padded Linear2 weight
                const_spec(b2_pad.shape),    # padded Linear2 bias
            ],
            out_specs=pl.BlockSpec((TB, OUT_PAD), lambda i: (i, 0)),
        ),
        compiler_params=pltpu.CompilerParams(
            dimension_semantics=("parallel",),
            vmem_limit_bytes=40 * 1024 * 1024),
        cost_estimate=cost,
    )(x1, x2, wt_f, wi_f, b1_f, w2_pad, b2_pad)

    # Slice back to the real 13 classes; restore the module's f32 output dtype.
    return out_padded[:, :OUT_CLASSES].astype(jnp.float32)


def make_params(text_dim, img_dim, key):
    """Deterministic synthetic parameters (small uniform init)."""
    ks = jax.random.split(key, 8)
    u = lambda k, shape, scale: jax.random.uniform(
        k, shape, jnp.float32, minval=-scale, maxval=scale)

    # Text_model: Linear(text_dim, 13); Image_model: Linear(img_dim, 13)
    wt = u(ks[0], (text_dim, 13), 1.0 / jnp.sqrt(text_dim))
    bt = u(ks[1], (1, 13), 1.0 / jnp.sqrt(text_dim))
    wi = u(ks[2], (img_dim, 13), 1.0 / jnp.sqrt(img_dim))
    bi = u(ks[3], (1, 13), 1.0 / jnp.sqrt(img_dim))

    # classifier: Linear(26, 16) -> ReLU -> Linear(16, 13) -> Softmax
    w1 = u(ks[4], (26, 16), 1.0 / jnp.sqrt(26.0))
    b1 = u(ks[5], (1, 16), 1.0 / jnp.sqrt(26.0))
    w2 = u(ks[6], (16, 13), 1.0 / jnp.sqrt(16.0))
    b2 = u(ks[7], (1, 13), 1.0 / jnp.sqrt(16.0))

    return {
        "wt": wt, "bt": bt, "wi": wi, "bi": bi,
        "w1a": w1[:13, :], "w1b": w1[13:, :], "b1": b1,
        "w2": w2, "b2": b2,
    }


def reference_forward(x1, x2_nchw, params):
    """Pure-JAX f32 reference matching the PyTorch forward."""
    B = x1.shape[0]
    x2 = x2_nchw.reshape(B, -1)
    t1 = x1 @ params["wt"] + params["bt"]
    t2 = x2 @ params["wi"] + params["bi"]
    cat = jnp.concatenate([t1, t2], axis=1)
    w1 = jnp.concatenate([params["w1a"], params["w1b"]], axis=0)
    h = jnp.maximum(cat @ w1 + params["b1"], 0.0)
    logits = h @ params["w2"] + params["b2"]
    return jax.nn.softmax(logits, axis=-1)


if __name__ == "__main__":
    B, TEXT_DIM = 8, 32
    C, H, W = 4, 16, 16
    IMG_DIM = C * H * W

    key = jax.random.PRNGKey(0)
    k_x1, k_x2 = jax.random.split(key)
    x1 = jax.random.normal(k_x1, (B, TEXT_DIM), dtype=jnp.float32)
    x2 = jax.random.normal(k_x2, (B, C, H, W), dtype=jnp.float32)

    params = make_params(TEXT_DIM, IMG_DIM, jax.random.PRNGKey(42))

    out = jax.jit(combined_model_forward)(x1, x2, params)
    out = jax.block_until_ready(out)

    # Sanity: shape, softmax rows ~sum to 1 (bf16 output quantization),
    # and agreement with the pure-JAX f32 reference at relaxed tolerance
    # (covers the bf16 image-path matmul).
    ref = reference_forward(x1, x2, params)
    assert out.shape == (B, OUT_CLASSES)
    assert jnp.allclose(jnp.sum(out, axis=-1), 1.0, atol=1e-2)
    assert jnp.allclose(out, ref, atol=5e-2)

    print("KERNEL_OK")
</pallas_src>

<mosaic_0001>
module attributes {stable_mosaic.version = 11 : i64} {
  func.func @_combined_kernel(%arg0: i32, %arg1: memref<16x32xf32, #tpu.memory_space<vmem>>, %arg2: memref<16x1024xf32, #tpu.memory_space<vmem>>, %arg3: memref<32x16xf32, #tpu.memory_space<vmem>>, %arg4: memref<1024x16xbf16, #tpu.memory_space<vmem>>, %arg5: memref<1x16xf32, #tpu.memory_space<vmem>>, %arg6: memref<16x128xf32, #tpu.memory_space<vmem>>, %arg7: memref<1x128xf32, #tpu.memory_space<vmem>>, %arg8: memref<16x128xbf16, #tpu.memory_space<vmem>>) attributes {dimension_semantics = [#tpu.dimension_semantics<parallel>], iteration_bounds = array<i64: 1>, scalar_prefetch = 0 : i64, scratch_operands = 0 : i64, tpu.core_type = #tpu.core_type<tc>, window_params = [{transform_indices = @transform_0, window_bounds = array<i64: 16, 32>}, {transform_indices = @transform_1, window_bounds = array<i64: 16, 1024>}, {pipeline_mode = #tpu.pipeline_mode<synchronous>, transform_indices = @transform_2, window_bounds = array<i64: 32, 16>}, {pipeline_mode = #tpu.pipeline_mode<synchronous>, transform_indices = @transform_3, window_bounds = array<i64: 1024, 16>}, {pipeline_mode = #tpu.pipeline_mode<synchronous>, transform_indices = @transform_4, window_bounds = array<i64: 1, 16>}, {pipeline_mode = #tpu.pipeline_mode<synchronous>, transform_indices = @transform_5, window_bounds = array<i64: 16, 128>}, {pipeline_mode = #tpu.pipeline_mode<synchronous>, transform_indices = @transform_6, window_bounds = array<i64: 1, 128>}, {transform_indices = @transform_7, window_bounds = array<i64: 16, 128>}]} {
    %c0 = arith.constant 0 : index
    %c0_0 = arith.constant 0 : index
    %0 = vector.load %arg2[%c0, %c0_0] : memref<16x1024xf32, #tpu.memory_space<vmem>>, vector<16x1024xf32>
    %1 = arith.truncf %0 : vector<16x1024xf32> to vector<16x1024xbf16>
    %c0_1 = arith.constant 0 : index
    %c0_2 = arith.constant 0 : index
    %2 = vector.load %arg1[%c0_1, %c0_2] : memref<16x32xf32, #tpu.memory_space<vmem>>, vector<16x32xf32>
    %c0_3 = arith.constant 0 : index
    %c0_4 = arith.constant 0 : index
    %3 = vector.load %arg3[%c0_3, %c0_4] : memref<32x16xf32, #tpu.memory_space<vmem>>, vector<32x16xf32>
    %cst = arith.constant dense<0.000000e+00> : vector<16x16xf32>
    %4 = tpu.matmul %2, %3, %cst {dimension_numbers = #tpu.dot_dimension_numbers<[1], [0], [0], [1], [0, 0, 1, 1], [], []>} : vector<16x32xf32>, vector<32x16xf32>, vector<16x16xf32> -> vector<16x16xf32>
    %c0_5 = arith.constant 0 : index
    %c0_6 = arith.constant 0 : index
    %5 = vector.load %arg4[%c0_5, %c0_6] : memref<1024x16xbf16, #tpu.memory_space<vmem>>, vector<1024x16xbf16>
    %cst_7 = arith.constant dense<0.000000e+00> : vector<16x16xf32>
    %6 = tpu.matmul %1, %5, %cst_7 {dimension_numbers = #tpu.dot_dimension_numbers<[1], [0], [0], [1], [0, 0, 1, 1], [], []>} : vector<16x1024xbf16>, vector<1024x16xbf16>, vector<16x16xf32> -> vector<16x16xf32>
    %7 = arith.addf %4, %6 : vector<16x16xf32>
    %c0_8 = arith.constant 0 : index
    %c0_9 = arith.constant 0 : index
    %8 = vector.load %arg5[%c0_8, %c0_9] : memref<1x16xf32, #tpu.memory_space<vmem>>, vector<1x16xf32>
    %9 = vector.broadcast %8 : vector<1x16xf32> to vector<16x16xf32>
    %10 = arith.addf %7, %9 : vector<16x16xf32>
    %cst_10 = arith.constant 0.000000e+00 : f32
    %11 = vector.broadcast %cst_10 : f32 to vector<16x16xf32>
    %12 = arith.maximumf %10, %11 : vector<16x16xf32>
    %c0_11 = arith.constant 0 : index
    %c0_12 = arith.constant 0 : index
    %13 = vector.load %arg6[%c0_11, %c0_12] : memref<16x128xf32, #tpu.memory_space<vmem>>, vector<16x128xf32>
    %cst_13 = arith.constant dense<0.000000e+00> : vector<16x128xf32>
    %14 = tpu.matmul %12, %13, %cst_13 {dimension_numbers = #tpu.dot_dimension_numbers<[1], [0], [0], [1], [0, 0, 1, 1], [], []>} : vector<16x16xf32>, vector<16x128xf32>, vector<16x128xf32> -> vector<16x128xf32>
    %c0_14 = arith.constant 0 : index
    %c0_15 = arith.constant 0 : index
    %15 = vector.load %arg7[%c0_14, %c0_15] : memref<1x128xf32, #tpu.memory_space<vmem>>, vector<1x128xf32>
    %16 = vector.broadcast %15 : vector<1x128xf32> to vector<16x128xf32>
    %17 = arith.addf %14, %16 : vector<16x128xf32>
    %cst_16 = arith.constant dense<0xFF800000> : vector<16xf32>
    %18 = vector.multi_reduction <maximumf>, %17, %cst_16 [1] : vector<16x128xf32> to vector<16xf32>
    %19 = vector.shape_cast %18 : vector<16xf32> to vector<16x1xf32>
    %20 = vector.broadcast %19 : vector<16x1xf32> to vector<16x128xf32>
    %21 = arith.subf %17, %20 : vector<16x128xf32>
    %22 = math.exp %21 : vector<16x128xf32>
    %cst_17 = arith.constant dense<0.000000e+00> : vector<16xf32>
    %23 = vector.multi_reduction <add>, %22, %cst_17 [1] : vector<16x128xf32> to vector<16xf32>
    %24 = vector.shape_cast %23 : vector<16xf32> to vector<16x1xf32>
    %cst_18 = arith.constant 1.000000e+00 : f32
    %25 = vector.broadcast %cst_18 : f32 to vector<16x1xf32>
    %26 = arith.divf %25, %24 : vector<16x1xf32>
    %27 = vector.broadcast %26 : vector<16x1xf32> to vector<16x128xf32>
    %28 = arith.mulf %22, %27 : vector<16x128xf32>
    %29 = arith.truncf %28 : vector<16x128xf32> to vector<16x128xbf16>
    %c0_19 = arith.constant 0 : index
    %c0_20 = arith.constant 0 : index
    %30 = vector.load %arg8[%c0_19, %c0_20] : memref<16x128xbf16, #tpu.memory_space<vmem>>, vector<16x128xbf16>
    tpu.vector_store %arg8[%c0_19, %c0_20], %29 {strides = array<i32>} : memref<16x128xbf16, #tpu.memory_space<vmem>>, vector<16x128xbf16>,
    return
  }
  func.func @transform_0(%arg0: i32) -> (i32, i32) {
    %c0_i32 = arith.constant 0 : i32
    %c0_i32_0 = arith.constant 0 : i32
    return %arg0, %c0_i32 : i32, i32
  }
  func.func @transform_1(%arg0: i32) -> (i32, i32) {
    %c0_i32 = arith.constant 0 : i32
    %c0_i32_0 = arith.constant 0 : i32
    return %arg0, %c0_i32 : i32, i32
  }
  func.func @transform_2(%arg0: i32) -> (i32, i32) {
    %c0_i32 = arith.constant 0 : i32
    %c0_i32_0 = arith.constant 0 : i32
    %c0_i32_1 = arith.constant 0 : i32
    return %c0_i32, %c0_i32_0 : i32, i32
  }
  func.func @transform_3(%arg0: i32) -> (i32, i32) {
    %c0_i32 = arith.constant 0 : i32
    %c0_i32_0 = arith.constant 0 : i32
    %c0_i32_1 = arith.constant 0 : i32
    return %c0_i32, %c0_i32_0 : i32, i32
  }
  func.func @transform_4(%arg0: i32) -> (i32, i32) {
    %c0_i32 = arith.constant 0 : i32
    %c0_i32_0 = arith.constant 0 : i32
    %c0_i32_1 = arith.constant 0 : i32
    return %c0_i32, %c0_i32_0 : i32, i32
  }
  func.func @transform_5(%arg0: i32) -> (i32, i32) {
    %c0_i32 = arith.constant 0 : i32
    %c0_i32_0 = arith.constant 0 : i32
    %c0_i32_1 = arith.constant 0 : i32
    return %c0_i32, %c0_i32_0 : i32, i32
  }
  func.func @transform_6(%arg0: i32) -> (i32, i32) {
    %c0_i32 = arith.constant 0 : i32
    %c0_i32_0 = arith.constant 0 : i32
    %c0_i32_1 = arith.constant 0 : i32
    return %c0_i32, %c0_i32_0 : i32, i32
  }
  func.func @transform_7(%arg0: i32) -> (i32, i32) {
    %c0_i32 = arith.constant 0 : i32
    %c0_i32_0 = arith.constant 0 : i32
    return %arg0, %c0_i32 : i32, i32
  }
}

</mosaic_0001>

<llo_original>
// kernel: combined_model_forward.1
$region0: #{combined_model_forward.1}
  #allocation0 [shape = 'u32[]', space=smem, size = 0x4, offset = 0x4, fixed_abs, tag = 'smem constant byte address 0x4 - core index']
  #allocation1 [shape = 'u32[72,128]{1,0:T(1,128)}', space=vmem, size = 0x9000, scoped, tag = 'internal scratch']
  %s0 = inlined_call_operand.vmem [shape: f32[8,32], index: 0, kind: input, shape index: {}]
  %s1 = inlined_call_operand.vmem [shape: f32[8,1024], index: 1, kind: input, shape index: {}]
  %s2 = inlined_call_operand.vmem [shape: f32[32,16], index: 2, kind: input, shape index: {}]
  %s3 = inlined_call_operand.vmem [shape: bf16[1024,16], index: 3, kind: input, shape index: {}]
  %s4 = inlined_call_operand.vmem [shape: f32[1,16], index: 4, kind: input, shape index: {}]
  %s5 = inlined_call_operand.vmem [shape: f32[16,128], index: 5, kind: input, shape index: {}]
  %s6 = inlined_call_operand.vmem [shape: f32[1,128], index: 6, kind: input, shape index: {}]
  %s7 = inlined_call_operand.vmem [shape: bf16[8,128], index: 7, kind: output, shape index: {}]
  %s8 = sld [smem:[#allocation0]]
  $region68: #{combined_model_forward.1} parent=0
    _
  %s10 = ssub.s32 1, %s8
  %s11 = scalar_select 0, %s10, %s8
  $region1: #{combined_model_forward.1} parent=0
    #allocation2 [shape = 'u8[4096]{0}', space=vmem, size = 0x1000, scoped, tag = 'output window, operand 0, single buffered']
    // Predicated region
    $region2: #{combined_model_forward.1} parent=1 // pred_check
      _
    $region3: #{combined_model_forward.1} parent=1 // pred_check_branch
      %13 = sbr.rel (0) target = $region5
    $region4: #{combined_model_forward.1} parent=1 // pred_region
      _
    $region5: #{combined_model_forward.1} parent=1 // pred_fallthru
      _
    // Predicated region
    $region6: #{combined_model_forward.1} parent=1 // pred_check
      _
    $region7: #{combined_model_forward.1} parent=1 // pred_check_branch
      %15 = sbr.rel (0) target = $region9
    $region8: #{combined_model_forward.1} parent=1 // pred_region
      _
    $region9: #{combined_model_forward.1} parent=1 // pred_fallthru
      _
    // Predicated region
    $region10: #{combined_model_forward.1} parent=1 // pred_check
      _
    $region11: #{combined_model_forward.1} parent=1 // pred_check_branch
      %17 = sbr.rel (0) target = $region13
    $region12: #{combined_model_forward.1} parent=1 // pred_region
      _
    $region13: #{combined_model_forward.1} parent=1 // pred_fallthru
      _
    // Predicated region
    $region14: #{combined_model_forward.1} parent=1 // pred_check
      _
    $region15: #{combined_model_forward.1} parent=1 // pred_check_branch
      %19 = sbr.rel (0) target = $region17
    $region16: #{combined_model_forward.1} parent=1 // pred_region
      _
    $region17: #{combined_model_forward.1} parent=1 // pred_fallthru
      _
    // Predicated region
    $region18: #{combined_model_forward.1} parent=1 // pred_check
      _
    $region19: #{combined_model_forward.1} parent=1 // pred_check_branch
      %21 = sbr.rel (0) target = $region21
    $region20: #{combined_model_forward.1} parent=1 // pred_region
      _
    $region21: #{combined_model_forward.1} parent=1 // pred_fallthru
      _
    // Predicated region
    $region22: #{combined_model_forward.1} parent=1 // pred_check
      _
    $region23: #{combined_model_forward.1} parent=1 // pred_check_branch
      %23 = sbr.rel (0) target = $region25
    $region24: #{combined_model_forward.1} parent=1 // pred_region
      _
    $region25: #{combined_model_forward.1} parent=1 // pred_fallthru
      _
    // Predicated region
    $region26: #{combined_model_forward.1} parent=1 // pred_check
      _
    $region27: #{combined_model_forward.1} parent=1 // pred_check_branch
      %25 = sbr.rel (0) target = $region29
    $region28: #{combined_model_forward.1} parent=1 // pred_region
      _
    $region29: #{combined_model_forward.1} parent=1 // pred_fallthru
      _
    %v26 = vld [vmem:[%s1] sm:$0xff]
    %v27 = vld [vmem:[%s1 + $0x8] sm:$0xff]
    %v28 = vld [vmem:[%s1 + $0x10] sm:$0xff]
    %v29 = vld [vmem:[%s1 + $0x18] sm:$0xff]
    %v30 = vld [vmem:[%s1 + $0x20] sm:$0xff]
    %v31 = vld [vmem:[%s1 + $0x28] sm:$0xff]
    %v32 = vld [vmem:[%s1 + $0x30] sm:$0xff]
    %v33 = vld [vmem:[%s1 + $0x38] sm:$0xff]
    %v34 = vld [vmem:[%s1 + $0x40] sm:$0xff]
    %v35 = vld [vmem:[%s1 + $0x48] sm:$0xff]
    %v36 = vld [vmem:[%s1 + $0x50] sm:$0xff]
    %v37 = vld [vmem:[%s1 + $0x58] sm:$0xff]
    %v38 = vld [vmem:[%s1 + $0x60] sm:$0xff]
    %v39 = vld [vmem:[%s1 + $0x68] sm:$0xff]
    %v40 = vld [vmem:[%s1 + $0x70] sm:$0xff]
    %v41 = vld [vmem:[%s1 + $0x78] sm:$0xff]
    %v42 = vpack.c.bf16 %v34, %v26
    %v43 = vpack.c.bf16 %v35, %v27
    %v44 = vpack.c.bf16 %v36, %v28
    %v45 = vpack.c.bf16 %v37, %v29
    %v46 = vpack.c.bf16 %v38, %v30
    %v47 = vpack.c.bf16 %v39, %v31
    %v48 = vpack.c.bf16 %v40, %v32
    %v49 = vpack.c.bf16 %v41, %v33
    %v50 = vld [vmem:[%s0] sm:$0xff]
    %v51 = vld [vmem:[%s0 + $0x8] sm:$0xff]
    %v52 = vld [vmem:[%s2] sm:$0xff]
    %v53 = vld [vmem:[%s2 + $0x8] sm:$0xff]
    %v54 = vld [vmem:[%s2 + $0x10] sm:$0xff]
    %v55 = vld [vmem:[%s2 + $0x18] sm:$0xff]
    %v56 = vld [vmem:[%s3] sm:$0xf]
    %v57 = vld [vmem:[%s3 + $0x4] sm:$0xf]
    %v58 = vld [vmem:[%s3 + $0x8] sm:$0xf]
    %v59 = vld [vmem:[%s3 + $0xc] sm:$0xf]
    %v60 = vld [vmem:[%s3 + $0x10] sm:$0xf]
    %v61 = vld [vmem:[%s3 + $0x14] sm:$0xf]
    %v62 = vld [vmem:[%s3 + $0x18] sm:$0xf]
    %v63 = vld [vmem:[%s3 + $0x1c] sm:$0xf]
    %v64 = vld [vmem:[%s3 + $0x20] sm:$0xf]
    %v65 = vld [vmem:[%s3 + $0x24] sm:$0xf]
    %v66 = vld [vmem:[%s3 + $0x28] sm:$0xf]
    %v67 = vld [vmem:[%s3 + $0x2c] sm:$0xf]
    %v68 = vld [vmem:[%s3 + $0x30] sm:$0xf]
    %v69 = vld [vmem:[%s3 + $0x34] sm:$0xf]
    %v70 = vld [vmem:[%s3 + $0x38] sm:$0xf]
    %v71 = vld [vmem:[%s3 + $0x3c] sm:$0xf]
    %v72 = vld [vmem:[%s3 + $0x40] sm:$0xf]
    %v73 = vld [vmem:[%s3 + $0x44] sm:$0xf]
    %v74 = vld [vmem:[%s3 + $0x48] sm:$0xf]
    %v75 = vld [vmem:[%s3 + $0x4c] sm:$0xf]
    %v76 = vld [vmem:[%s3 + $0x50] sm:$0xf]
    %v77 = vld [vmem:[%s3 + $0x54] sm:$0xf]
    %v78 = vld [vmem:[%s3 + $0x58] sm:$0xf]
    %v79 = vld [vmem:[%s3 + $0x5c] sm:$0xf]
    %v80 = vld [vmem:[%s3 + $0x60] sm:$0xf]
    %v81 = vld [vmem:[%s3 + $0x64] sm:$0xf]
    %v82 = vld [vmem:[%s3 + $0x68] sm:$0xf]
    %v83 = vld [vmem:[%s3 + $0x6c] sm:$0xf]
    %v84 = vld [vmem:[%s3 + $0x70] sm:$0xf]
    %v85 = vld [vmem:[%s3 + $0x74] sm:$0xf]
    %v86 = vld [vmem:[%s3 + $0x78] sm:$0xf]
    %v87 = vld [vmem:[%s3 + $0x7c] sm:$0xf]
    %v88 = vld [vmem:[%s3 + $0x80] sm:$0xf]
    %v89 = vld [vmem:[%s3 + $0x84] sm:$0xf]
    %v90 = vld [vmem:[%s3 + $0x88] sm:$0xf]
    %v91 = vld [vmem:[%s3 + $0x8c] sm:$0xf]
    %v92 = vld [vmem:[%s3 + $0x90] sm:$0xf]
    %v93 = vld [vmem:[%s3 + $0x94] sm:$0xf]
    %v94 = vld [vmem:[%s3 + $0x98] sm:$0xf]
    %v95 = vld [vmem:[%s3 + $0x9c] sm:$0xf]
    %v96 = vld [vmem:[%s3 + $0xa0] sm:$0xf]
    %v97 = vld [vmem:[%s3 + $0xa4] sm:$0xf]
    %v98 = vld [vmem:[%s3 + $0xa8] sm:$0xf]
    %v99 = vld [vmem:[%s3 + $0xac] sm:$0xf]
    %v100 = vld [vmem:[%s3 + $0xb0] sm:$0xf]
    %v101 = vld [vmem:[%s3 + $0xb4] sm:$0xf]
    %v102 = vld [vmem:[%s3 + $0xb8] sm:$0xf]
    %v103 = vld [vmem:[%s3 + $0xbc] sm:$0xf]
    %v104 = vld [vmem:[%s3 + $0xc0] sm:$0xf]
    %v105 = vld [vmem:[%s3 + $0xc4] sm:$0xf]
    %v106 = vld [vmem:[%s3 + $0xc8] sm:$0xf]
    %v107 = vld [vmem:[%s3 + $0xcc] sm:$0xf]
    %v108 = vld [vmem:[%s3 + $0xd0] sm:$0xf]
    %v109 = vld [vmem:[%s3 + $0xd4] sm:$0xf]
    %v110 = vld [vmem:[%s3 + $0xd8] sm:$0xf]
    %v111 = vld [vmem:[%s3 + $0xdc] sm:$0xf]
    %v112 = vld [vmem:[%s3 + $0xe0] sm:$0xf]
    %v113 = vld [vmem:[%s3 + $0xe4] sm:$0xf]
    %v114 = vld [vmem:[%s3 + $0xe8] sm:$0xf]
    %v115 = vld [vmem:[%s3 + $0xec] sm:$0xf]
    %v116 = vld [vmem:[%s3 + $0xf0] sm:$0xf]
    %v117 = vld [vmem:[%s3 + $0xf4] sm:$0xf]
    %v118 = vld [vmem:[%s3 + $0xf8] sm:$0xf]
    %v119 = vld [vmem:[%s3 + $0xfc] sm:$0xf]
    %v120 = vld [vmem:[%s3 + $0x100] sm:$0xf]
    %v121 = vld [vmem:[%s3 + $0x104] sm:$0xf]
    %v122 = vld [vmem:[%s3 + $0x108] sm:$0xf]
    %v123 = vld [vmem:[%s3 + $0x10c] sm:$0xf]
    %v124 = vld [vmem:[%s3 + $0x110] sm:$0xf]
    %v125 = vld [vmem:[%s3 + $0x114] sm:$0xf]
    %v126 = vld [vmem:[%s3 + $0x118] sm:$0xf]
    %v127 = vld [vmem:[%s3 + $0x11c] sm:$0xf]
    %v128 = vld [vmem:[%s3 + $0x120] sm:$0xf]
    %v129 = vld [vmem:[%s3 + $0x124] sm:$0xf]
    %v130 = vld [vmem:[%s3 + $0x128] sm:$0xf]
    %v131 = vld [vmem:[%s3 + $0x12c] sm:$0xf]
    %v132 = vld [vmem:[%s3 + $0x130] sm:$0xf]
    %v133 = vld [vmem:[%s3 + $0x134] sm:$0xf]
    %v134 = vld [vmem:[%s3 + $0x138] sm:$0xf]
    %v135 = vld [vmem:[%s3 + $0x13c] sm:$0xf]
    %v136 = vld [vmem:[%s3 + $0x140] sm:$0xf]
    %v137 = vld [vmem:[%s3 + $0x144] sm:$0xf]
    %v138 = vld [vmem:[%s3 + $0x148] sm:$0xf]
    %v139 = vld [vmem:[%s3 + $0x14c] sm:$0xf]
    %v140 = vld [vmem:[%s3 + $0x150] sm:$0xf]
    %v141 = vld [vmem:[%s3 + $0x154] sm:$0xf]
    %v142 = vld [vmem:[%s3 + $0x158] sm:$0xf]
    %v143 = vld [vmem:[%s3 + $0x15c] sm:$0xf]
    %v144 = vld [vmem:[%s3 + $0x160] sm:$0xf]
    %v145 = vld [vmem:[%s3 + $0x164] sm:$0xf]
    %v146 = vld [vmem:[%s3 + $0x168] sm:$0xf]
    %v147 = vld [vmem:[%s3 + $0x16c] sm:$0xf]
    %v148 = vld [vmem:[%s3 + $0x170] sm:$0xf]
    %v149 = vld [vmem:[%s3 + $0x174] sm:$0xf]
    %v150 = vld [vmem:[%s3 + $0x178] sm:$0xf]
    %v151 = vld [vmem:[%s3 + $0x17c] sm:$0xf]
    %v152 = vld [vmem:[%s3 + $0x180] sm:$0xf]
    %v153 = vld [vmem:[%s3 + $0x184] sm:$0xf]
    %v154 = vld [vmem:[%s3 + $0x188] sm:$0xf]
    %v155 = vld [vmem:[%s3 + $0x18c] sm:$0xf]
    %v156 = vld [vmem:[%s3 + $0x190] sm:$0xf]
    %v157 = vld [vmem:[%s3 + $0x194] sm:$0xf]
    %v158 = vld [vmem:[%s3 + $0x198] sm:$0xf]
    %v159 = vld [vmem:[%s3 + $0x19c] sm:$0xf]
    %v160 = vld [vmem:[%s3 + $0x1a0] sm:$0xf]
    %v161 = vld [vmem:[%s3 + $0x1a4] sm:$0xf]
    %v162 = vld [vmem:[%s3 + $0x1a8] sm:$0xf]
    %v163 = vld [vmem:[%s3 + $0x1ac] sm:$0xf]
    %v164 = vld [vmem:[%s3 + $0x1b0] sm:$0xf]
    %v165 = vld [vmem:[%s3 + $0x1b4] sm:$0xf]
    %v166 = vld [vmem:[%s3 + $0x1b8] sm:$0xf]
    %v167 = vld [vmem:[%s3 + $0x1bc] sm:$0xf]
    %v168 = vld [vmem:[%s3 + $0x1c0] sm:$0xf]
    %v169 = vld [vmem:[%s3 + $0x1c4] sm:$0xf]
    %v170 = vld [vmem:[%s3 + $0x1c8] sm:$0xf]
    %v171 = vld [vmem:[%s3 + $0x1cc] sm:$0xf]
    %v172 = vld [vmem:[%s3 + $0x1d0] sm:$0xf]
    %v173 = vld [vmem:[%s3 + $0x1d4] sm:$0xf]
    %v174 = vld [vmem:[%s3 + $0x1d8] sm:$0xf]
    %v175 = vld [vmem:[%s3 + $0x1dc] sm:$0xf]
    %v176 = vld [vmem:[%s3 + $0x1e0] sm:$0xf]
    %v177 = vld [vmem:[%s3 + $0x1e4] sm:$0xf]
    %v178 = vld [vmem:[%s3 + $0x1e8] sm:$0xf]
    %v179 = vld [vmem:[%s3 + $0x1ec] sm:$0xf]
    %v180 = vld [vmem:[%s3 + $0x1f0] sm:$0xf]
    %v181 = vld [vmem:[%s3 + $0x1f4] sm:$0xf]
    %v182 = vld [vmem:[%s3 + $0x1f8] sm:$0xf]
    %v183 = vld [vmem:[%s3 + $0x1fc] sm:$0xf]
    %v312 = vunpack.c.l.b16 %v56
    %v313 = vunpack.c.l.b16 %v57
    %v314 = vunpack.c.l.b16 %v58
    %v315 = vunpack.c.l.b16 %v59
    %v316 = vunpack.c.l.b16 %v60
    %v317 = vunpack.c.l.b16 %v61
    %v318 = vunpack.c.l.b16 %v62
    %v319 = vunpack.c.l.b16 %v63
    %v320 = vunpack.c.l.b16 %v64
    %v321 = vunpack.c.l.b16 %v65
    %v322 = vunpack.c.l.b16 %v66
    %v323 = vunpack.c.l.b16 %v67
    %v324 = vunpack.c.l.b16 %v68
    %v325 = vunpack.c.l.b16 %v69
    %v326 = vunpack.c.l.b16 %v70
    %v327 = vunpack.c.l.b16 %v71
    %v328 = vunpack.c.l.b16 %v72
    %v329 = vunpack.c.l.b16 %v73
    %v330 = vunpack.c.l.b16 %v74
    %v331 = vunpack.c.l.b16 %v75
    %v332 = vunpack.c.l.b16 %v76
    %v333 = vunpack.c.l.b16 %v77
    %v334 = vunpack.c.l.b16 %v78
    %v335 = vunpack.c.l.b16 %v79
    %v336 = vunpack.c.l.b16 %v80
    %v337 = vunpack.c.l.b16 %v81
    %v338 = vunpack.c.l.b16 %v82
    %v339 = vunpack.c.l.b16 %v83
    %v340 = vunpack.c.l.b16 %v84
    %v341 = vunpack.c.l.b16 %v85
    %v342 = vunpack.c.l.b16 %v86
    %v343 = vunpack.c.l.b16 %v87
    %v344 = vunpack.c.l.b16 %v88
    %v345 = vunpack.c.l.b16 %v89
    %v346 = vunpack.c.l.b16 %v90
    %v347 = vunpack.c.l.b16 %v91
    %v348 = vunpack.c.l.b16 %v92
    %v349 = vunpack.c.l.b16 %v93
    %v350 = vunpack.c.l.b16 %v94
    %v351 = vunpack.c.l.b16 %v95
    %v352 = vunpack.c.l.b16 %v96
    %v353 = vunpack.c.l.b16 %v97
    %v354 = vunpack.c.l.b16 %v98
    %v355 = vunpack.c.l.b16 %v99
    %v356 = vunpack.c.l.b16 %v100
    %v357 = vunpack.c.l.b16 %v101
    %v358 = vunpack.c.l.b16 %v102
    %v359 = vunpack.c.l.b16 %v103
    %v360 = vunpack.c.l.b16 %v104
    %v361 = vunpack.c.l.b16 %v105
    %v362 = vunpack.c.l.b16 %v106
    %v363 = vunpack.c.l.b16 %v107
    %v364 = vunpack.c.l.b16 %v108
    %v365 = vunpack.c.l.b16 %v109
    %v366 = vunpack.c.l.b16 %v110
    %v367 = vunpack.c.l.b16 %v111
    %v368 = vunpack.c.l.b16 %v112
    %v369 = vunpack.c.l.b16 %v113
    %v370 = vunpack.c.l.b16 %v114
    %v371 = vunpack.c.l.b16 %v115
    %v372 = vunpack.c.l.b16 %v116
    %v373 = vunpack.c.l.b16 %v117
    %v374 = vunpack.c.l.b16 %v118
    %v375 = vunpack.c.l.b16 %v119
    %v376 = vunpack.c.l.b16 %v120
    %v377 = vunpack.c.l.b16 %v121
    %v378 = vunpack.c.l.b16 %v122
    %v379 = vunpack.c.l.b16 %v123
    %v380 = vunpack.c.l.b16 %v124
    %v381 = vunpack.c.l.b16 %v125
    %v382 = vunpack.c.l.b16 %v126
    %v383 = vunpack.c.l.b16 %v127
    %v384 = vunpack.c.l.b16 %v128
    %v385 = vunpack.c.l.b16 %v129
    %v386 = vunpack.c.l.b16 %v130
    %v387 = vunpack.c.l.b16 %v131
    %v388 = vunpack.c.l.b16 %v132
    %v389 = vunpack.c.l.b16 %v133
    %v390 = vunpack.c.l.b16 %v134
    %v391 = vunpack.c.l.b16 %v135
    %v392 = vunpack.c.l.b16 %v136
    %v393 = vunpack.c.l.b16 %v137
    %v394 = vunpack.c.l.b16 %v138
    %v395 = vunpack.c.l.b16 %v139
    %v396 = vunpack.c.l.b16 %v140
    %v397 = vunpack.c.l.b16 %v141
    %v398 = vunpack.c.l.b16 %v142
    %v399 = vunpack.c.l.b16 %v143
    %v400 = vunpack.c.l.b16 %v144
    %v401 = vunpack.c.l.b16 %v145
    %v402 = vunpack.c.l.b16 %v146
    %v403 = vunpack.c.l.b16 %v147
    %v404 = vunpack.c.l.b16 %v148
    %v405 = vunpack.c.l.b16 %v149
    %v406 = vunpack.c.l.b16 %v150
    %v407 = vunpack.c.l.b16 %v151
    %v408 = vunpack.c.l.b16 %v152
    %v409 = vunpack.c.l.b16 %v153
    %v410 = vunpack.c.l.b16 %v154
    %v411 = vunpack.c.l.b16 %v155
    %v412 = vunpack.c.l.b16 %v156
    %v413 = vunpack.c.l.b16 %v157
    %v414 = vunpack.c.l.b16 %v158
    %v415 = vunpack.c.l.b16 %v159
    %v416 = vunpack.c.l.b16 %v160
    %v417 = vunpack.c.l.b16 %v161
    %v418 = vunpack.c.l.b16 %v162
    %v419 = vunpack.c.l.b16 %v163
    %v420 = vunpack.c.l.b16 %v164
    %v421 = vunpack.c.l.b16 %v165
    %v422 = vunpack.c.l.b16 %v166
    %v423 = vunpack.c.l.b16 %v167
    %v424 = vunpack.c.l.b16 %v168
    %v425 = vunpack.c.l.b16 %v169
    %v426 = vunpack.c.l.b16 %v170
    %v427 = vunpack.c.l.b16 %v171
    %v428 = vunpack.c.l.b16 %v172
    %v429 = vunpack.c.l.b16 %v173
    %v430 = vunpack.c.l.b16 %v174
    %v431 = vunpack.c.l.b16 %v175
    %v432 = vunpack.c.l.b16 %v176
    %v433 = vunpack.c.l.b16 %v177
    %v434 = vunpack.c.l.b16 %v178
    %v435 = vunpack.c.l.b16 %v179
    %v436 = vunpack.c.l.b16 %v180
    %v437 = vunpack.c.l.b16 %v181
    %v438 = vunpack.c.l.b16 %v182
    %v439 = vunpack.c.l.b16 %v183
    %v440 = vpack.c.b16 %v313, %v312
    %v441 = vpack.c.b16 %v315, %v314
    %v442 = vpack.c.b16 %v317, %v316
    %v443 = vpack.c.b16 %v319, %v318
    %v444 = vpack.c.b16 %v321, %v320
    %v445 = vpack.c.b16 %v323, %v322
    %v446 = vpack.c.b16 %v325, %v324
    %v447 = vpack.c.b16 %v327, %v326
    %v448 = vpack.c.b16 %v329, %v328
    %v449 = vpack.c.b16 %v331, %v330
    %v450 = vpack.c.b16 %v333, %v332
    %v451 = vpack.c.b16 %v335, %v334
    %v452 = vpack.c.b16 %v337, %v336
    %v453 = vpack.c.b16 %v339, %v338
    %v454 = vpack.c.b16 %v341, %v340
    %v455 = vpack.c.b16 %v343, %v342
    %v456 = vpack.c.b16 %v345, %v344
    %v457 = vpack.c.b16 %v347, %v346
    %v458 = vpack.c.b16 %v349, %v348
    %v459 = vpack.c.b16 %v351, %v350
    %v460 = vpack.c.b16 %v353, %v352
    %v461 = vpack.c.b16 %v355, %v354
    %v462 = vpack.c.b16 %v357, %v356
    %v463 = vpack.c.b16 %v359, %v358
    %v464 = vpack.c.b16 %v361, %v360
    %v465 = vpack.c.b16 %v363, %v362
    %v466 = vpack.c.b16 %v365, %v364
    %v467 = vpack.c.b16 %v367, %v366
    %v468 = vpack.c.b16 %v369, %v368
    %v469 = vpack.c.b16 %v371, %v370
    %v470 = vpack.c.b16 %v373, %v372
    %v471 = vpack.c.b16 %v375, %v374
    %v472 = vpack.c.b16 %v377, %v376
    %v473 = vpack.c.b16 %v379, %v378
    %v474 = vpack.c.b16 %v381, %v380
    %v475 = vpack.c.b16 %v383, %v382
    %v476 = vpack.c.b16 %v385, %v384
    %v477 = vpack.c.b16 %v387, %v386
    %v478 = vpack.c.b16 %v389, %v388
    %v479 = vpack.c.b16 %v391, %v390
    %v480 = vpack.c.b16 %v393, %v392
    %v481 = vpack.c.b16 %v395, %v394
    %v482 = vpack.c.b16 %v397, %v396
    %v483 = vpack.c.b16 %v399, %v398
    %v484 = vpack.c.b16 %v401, %v400
    %v485 = vpack.c.b16 %v403, %v402
    %v486 = vpack.c.b16 %v405, %v404
    %v487 = vpack.c.b16 %v407, %v406
    %v488 = vpack.c.b16 %v409, %v408
    %v489 = vpack.c.b16 %v411, %v410
    %v490 = vpack.c.b16 %v413, %v412
    %v491 = vpack.c.b16 %v415, %v414
    %v492 = vpack.c.b16 %v417, %v416
    %v493 = vpack.c.b16 %v419, %v418
    %v494 = vpack.c.b16 %v421, %v420
    %v495 = vpack.c.b16 %v423, %v422
    %v496 = vpack.c.b16 %v425, %v424
    %v497 = vpack.c.b16 %v427, %v426
    %v498 = vpack.c.b16 %v429, %v428
    %v499 = vpack.c.b16 %v431, %v430
    %v500 = vpack.c.b16 %v433, %v432
    %v501 = vpack.c.b16 %v435, %v434
    %v502 = vpack.c.b16 %v437, %v436
    %v503 = vpack.c.b16 %v439, %v438
    %568 = vmatpush.bf16.msra.mxu0 %v447
    %569 = vmatpush.bf16.msra.mxu0 %v446
    %570 = vmatpush.bf16.msra.mxu0 %v445
    %571 = vmatpush.bf16.msra.mxu0 %v444
    %572 = vmatpush.bf16.msra.mxu0 %v443
    %573 = vmatpush.bf16.msra.mxu0 %v442
    %574 = vmatpush.bf16.msra.mxu0 %v441
    %575 = vmatpush.bf16.msra.mxu0 %v440
    %576 = vmatmul.bf16.gmra.mxu0 %v42
    %v577 = vpop.f32.mrf.mxu0
    %v578 = vadd.f32 0.0, %v577
    %v579 = vpop.f32.mrf.mxu0
    %v580 = vadd.f32 0.0, %v579
    %581 = vdwg.mxu0
    %582 = vmatpush.bf16.msra.mxu0 %v455
    %583 = vmatpush.bf16.msra.mxu0 %v454
    %584 = vmatpush.bf16.msra.mxu0 %v453
    %585 = vmatpush.bf16.msra.mxu0 %v452
    %586 = vmatpush.bf16.msra.mxu0 %v451
    %587 = vmatpush.bf16.msra.mxu0 %v450
    %588 = vmatpush.bf16.msra.mxu0 %v449
    %589 = vmatpush.bf16.msra.mxu0 %v448
    %590 = vmatmul.bf16.gmra.mxu0 %v43
    %v591 = vpop.f32.mrf.mxu0
    %v592 = vadd.f32 %v578, %v591
    %v593 = vpop.f32.mrf.mxu0
    %v594 = vadd.f32 %v580, %v593
    %595 = vdwg.mxu0
    %596 = vmatpush.bf16.msra.mxu0 %v463
    %597 = vmatpush.bf16.msra.mxu0 %v462
    %598 = vmatpush.bf16.msra.mxu0 %v461
    %599 = vmatpush.bf16.msra.mxu0 %v460
    %600 = vmatpush.bf16.msra.mxu0 %v459
    %601 = vmatpush.bf16.msra.mxu0 %v458
    %602 = vmatpush.bf16.msra.mxu0 %v457
    %603 = vmatpush.bf16.msra.mxu0 %v456
    %604 = vmatmul.bf16.gmra.mxu0 %v44
    %v605 = vpop.f32.mrf.mxu0
    %v606 = vadd.f32 %v592, %v605
    %v607 = vpop.f32.mrf.mxu0
    %v608 = vadd.f32 %v594, %v607
    %609 = vdwg.mxu0
    %610 = vmatpush.bf16.msra.mxu0 %v471
    %611 = vmatpush.bf16.msra.mxu0 %v470
    %612 = vmatpush.bf16.msra.mxu0 %v469
    %613 = vmatpush.bf16.msra.mxu0 %v468
    %614 = vmatpush.bf16.msra.mxu0 %v467
    %615 = vmatpush.bf16.msra.mxu0 %v466
    %616 = vmatpush.bf16.msra.mxu0 %v465
    %617 = vmatpush.bf16.msra.mxu0 %v464
    %618 = vmatmul.bf16.gmra.mxu0 %v45
    %v619 = vpop.f32.mrf.mxu0
    %v620 = vadd.f32 %v606, %v619
    %v621 = vpop.f32.mrf.mxu0
    %v622 = vadd.f32 %v608, %v621
    %623 = vdwg.mxu0
    %624 = vmatpush.bf16.msra.mxu0 %v479
    %625 = vmatpush.bf16.msra.mxu0 %v478
    %626 = vmatpush.bf16.msra.mxu0 %v477
    %627 = vmatpush.bf16.msra.mxu0 %v476
    %628 = vmatpush.bf16.msra.mxu0 %v475
    %629 = vmatpush.bf16.msra.mxu0 %v474
    %630 = vmatpush.bf16.msra.mxu0 %v473
    %631 = vmatpush.bf16.msra.mxu0 %v472
    %632 = vmatmul.bf16.gmra.mxu0 %v46
    %v633 = vpop.f32.mrf.mxu0
    %v634 = vadd.f32 %v620, %v633
    %v635 = vpop.f32.mrf.mxu0
    %v636 = vadd.f32 %v622, %v635
    %637 = vdwg.mxu0
    %638 = vmatpush.bf16.msra.mxu0 %v487
    %639 = vmatpush.bf16.msra.mxu0 %v486
    %640 = vmatpush.bf16.msra.mxu0 %v485
    %641 = vmatpush.bf16.msra.mxu0 %v484
    %642 = vmatpush.bf16.msra.mxu0 %v483
    %643 = vmatpush.bf16.msra.mxu0 %v482
    %644 = vmatpush.bf16.msra.mxu0 %v481
    %645 = vmatpush.bf16.msra.mxu0 %v480
    %646 = vmatmul.bf16.gmra.mxu0 %v47
    %v647 = vpop.f32.mrf.mxu0
    %v648 = vadd.f32 %v634, %v647
    %v649 = vpop.f32.mrf.mxu0
    %v650 = vadd.f32 %v636, %v649
    %651 = vdwg.mxu0
    %652 = vmatpush.bf16.msra.mxu0 %v495
    %653 = vmatpush.bf16.msra.mxu0 %v494
    %654 = vmatpush.bf16.msra.mxu0 %v493
    %655 = vmatpush.bf16.msra.mxu0 %v492
    %656 = vmatpush.bf16.msra.mxu0 %v491
    %657 = vmatpush.bf16.msra.mxu0 %v490
    %658 = vmatpush.bf16.msra.mxu0 %v489
    %659 = vmatpush.bf16.msra.mxu0 %v488
    %660 = vmatmul.bf16.gmra.mxu0 %v48
    %v661 = vpop.f32.mrf.mxu0
    %v662 = vadd.f32 %v648, %v661
    %v663 = vpop.f32.mrf.mxu0
    %v664 = vadd.f32 %v650, %v663
    %665 = vdwg.mxu0
    %666 = vmatpush.bf16.msra.mxu0 %v503
    %667 = vmatpush.bf16.msra.mxu0 %v502
    %668 = vmatpush.bf16.msra.mxu0 %v501
    %669 = vmatpush.bf16.msra.mxu0 %v500
    %670 = vmatpush.bf16.msra.mxu0 %v499
    %671 = vmatpush.bf16.msra.mxu0 %v498
    %672 = vmatpush.bf16.msra.mxu0 %v497
    %673 = vmatpush.bf16.msra.mxu0 %v496
    %674 = vmatmul.bf16.gmra.mxu0 %v49
    %v675 = vpop.f32.mrf.mxu0
    %v676 = vadd.f32 %v662, %v675
    %v677 = vpop.f32.mrf.mxu0
    %v678 = vadd.f32 %v664, %v677
    %679 = vdwg.mxu0
    %vm680 = vcmask 261120
    %v682 = vsel %vm680, %v50, 0
    %v685 = vsel %vm680, %v51, 0
    %687 = vmatpush.msra.mxu0 0.0
    %688 = vmatpush.msra.mxu0 0.0
    %689 = vmatpush.msra.mxu0 0.0
    %690 = vmatpush.msra.mxu0 0.0
    %691 = vmatpush.msra.mxu0 0.0
    %692 = vmatpush.msra.mxu0 0.0
    %693 = vmatpush.msra.mxu0 0.0
    %694 = vmatpush.msra.mxu0 0.0
    %695 = vmatpush.msra.mxu0 0.0
    %696 = vmatpush.msra.mxu0 0.0
    %697 = vmatpush.msra.mxu0 0.0
    %698 = vmatpush.msra.mxu0 0.0
    %699 = vmatpush.msra.mxu0 %v55
    %700 = vmatpush.msra.mxu0 %v54
    %701 = vmatpush.msra.mxu0 %v53
    %702 = vmatpush.msra.mxu0 %v52
    %703 = vmatmul.f32.gmra.mxu0 %v682
    %v704 = vpop.f32.mrf.mxu0
    %v705 = vadd.f32 %v676, %v704
    %706 = vmatmul.f32.gmra.mxu0 %v685
    %v707 = vpop.f32.mrf.mxu0
    %v708 = vadd.f32 %v678, %v707
    %709 = vdwg.mxu0
    %v710 = vld [vmem:[%s4] sm:$0x1]
    %v712 = vperm.slane %v710, 0
    %v714 = vadd.f32 %v705, %v712
    %v715 = vadd.f32 %v708, %v712
    %v716 = vmax.f32 %v714, 0.0
    %v717 = vmax.f32 %v715, 0.0
    %v718 = vld [vmem:[%s5] sm:$0xff]
    %v719 = vld [vmem:[%s5 + $0x8] sm:$0xff]
    %v720 = vld [vmem:[%s6] sm:$0x1]
    %v722 = vperm.slane %v720, 0
    %vm724 = vcmask 130048
    %v726 = vsel %vm724, %v716, 0
    %v729 = vsel %vm724, %v717, 0
    %731 = vmatpush.msra.mxu0 0.0
    %732 = vmatpush.msra.mxu0 0.0
    %733 = vmatpush.msra.mxu0 0.0
    %734 = vmatpush.msra.mxu0 0.0
    %735 = vmatpush.msra.mxu0 0.0
    %736 = vmatpush.msra.mxu0 0.0
    %737 = vmatpush.msra.mxu0 0.0
    %738 = vmatpush.msra.mxu0 0.0
    %739 = vmatpush.msra.mxu0 0.0
    %740 = vmatpush.msra.mxu0 0.0
    %741 = vmatpush.msra.mxu0 0.0
    %742 = vmatpush.msra.mxu0 0.0
    %743 = vmatpush.msra.mxu0 0.0
    %744 = vmatpush.msra.mxu0 0.0
    %745 = vmatpush.msra.mxu0 %v719
    %746 = vmatpush.msra.mxu0 %v718
    %747 = vmatmul.f32.gmra.mxu0 %v726
    %v748 = vpop.f32.mrf.mxu0
    %v749 = vadd.f32 %v722, %v748
    %750 = vmatmul.f32.gmra.mxu0 %v729
    %v751 = vpop.f32.mrf.mxu0
    %v752 = vadd.f32 %v722, %v751
    %753 = vdwg.mxu0
    %754 = vmax.xlane.f32.xlu0 %v749
    %v755 = vpop.xlane.xlu0 %754
    %756 = vmax.xlane.f32.xlu0 %v752
    %v757 = vpop.xlane.xlu0 %756
    %v758 = vsub.f32 %v749, %v755
    %v759 = vsub.f32 %v752, %v757
    %v760 = vmul.f32 %v758, 1.442695
    %v761 = vpow.pop %v760
    %v762 = vmul.f32 %v759, 1.442695
    %v763 = vpow.pop %v762
    %764 = vadd.xlane.f32.xlu0 %v761
    %v765 = vpop.xlane.xlu0 %764
    %766 = vadd.xlane.f32.xlu0 %v763
    %v767 = vpop.xlane.xlu0 %766
    %v768 = vrcp.pop %v765
    %v769 = vmul.f32 %v765, %v768
    %v770 = vsub.f32 1.0, %v769
    %v771 = vmul.f32 %v768, %v770
    %v772 = vadd.f32 %v768, %v771
    %vm773 = vweird.f32 %v765
    %vm774 = vweird.f32 %v768
    %vm775 = vmor %vm773, %vm774
    %v776 = vsel %vm775, %v768, %v772
    %v777 = vand.u32 2147483647, %v765
    %vm778 = vcmp.eq.f32.partialorder %v777, 8.507059e+37
    %v779 = vand.u32 %v765, 2147483648
    %v780 = vor.u32 1.1754944e-38, %v779
    %v781 = vsel %vm778, %v780, %v776
    %v782 = vmul.f32 1.0, %v781
    %v783 = vrcp.pop %v767
    %v784 = vmul.f32 %v767, %v783
    %v785 = vsub.f32 1.0, %v784
    %v786 = vmul.f32 %v783, %v785
    %v787 = vadd.f32 %v783, %v786
    %vm788 = vweird.f32 %v767
    %vm789 = vweird.f32 %v783
    %vm790 = vmor %vm788, %vm789
    %v791 = vsel %vm790, %v783, %v787
    %v792 = vand.u32 2147483647, %v767
    %vm793 = vcmp.eq.f32.partialorder %v792, 8.507059e+37
    %v794 = vand.u32 %v767, 2147483648
    %v795 = vor.u32 1.1754944e-38, %v794
    %v796 = vsel %vm793, %v795, %v791
    %v797 = vmul.f32 1.0, %v796
    %v798 = vmul.f32 %v761, %v782
    %v799 = vmul.f32 %v763, %v797
    %v800 = vpack.c.bf16 %v798, %v798
    %v801 = vpack.c.bf16 %v799, %v799
    %802 = vst [vmem:[#allocation2] sm:$0xf] %v800
    %803 = vst [vmem:[#allocation2 + $0x4] sm:$0xf] %v801
    // Predicated region
    $region30: #{combined_model_forward.1} parent=1 // pred_check
      _
    $region31: #{combined_model_forward.1} parent=1 // pred_check_branch
      %805 = sbr.rel (0) target = $region33
    $region32: #{combined_model_forward.1} parent=1 // pred_region
      // Predicated region
      $region34: #{combined_model_forward.1} parent=32 // pred_check
        _
      $region35: #{combined_model_forward.1} parent=32 // pred_check_branch
        %807 = sbr.rel (0) target = $region37
      $region36: #{combined_model_forward.1} parent=32 // pred_region
        // Predicated region
        $region38: #{combined_model_forward.1} parent=36 // pred_check
          _
        $region39: #{combined_model_forward.1} parent=36 // pred_check_branch
          %809 = sbr.rel target = $region41
        $region40: #{combined_model_forward.1} parent=36 // pred_region
          // Predicated region
          $region53: #{combined_model_forward.1} parent=40 // pred_check
            _
          $region54: #{combined_model_forward.1} parent=40 // pred_check_branch
            %825 = sbr.rel (0) target = $region56
          $region55: #{combined_model_forward.1} parent=40 // pred_region
            %s827 = ssub.s32 16, 1
            loop: start=0, step=1, limit=1
            $region57: #{combined_model_forward.1} parent=55 // loop_pre_header
              _
            $region58: #{combined_model_forward.1} parent=55 // loop_header
              %s829 = sphi 0, %s833
              %p830 = scmp.ge.s32.totalorder %s829, 1
              %s834 = sphi [#allocation2], [#allocation2]
              %s835 = sphi %s7, %s7
            $region59: #{combined_model_forward.1} parent=55 // loop_header_branch
              %832 = sbr.rel (%p830) target = $region63
            $region60: #{combined_model_forward.1} parent=55 // loop_body
              %v836 = vld [vmem:[%s834] sm:%s827]
              %837 = vst [vmem:[%s835] sm:%s827] %v836
            $region61: #{combined_model_forward.1} parent=55 // loop_footer
              %s833 = sadd.s32 1, %s829
            $region62: #{combined_model_forward.1} parent=55 // loop_footer_branch
              %828 = sbr.rel target = $region58
            $region63: #{combined_model_forward.1} parent=55 // loop_exit
              _
          $region56: #{combined_model_forward.1} parent=40 // pred_fallthru
            _
        $region41: #{combined_model_forward.1} parent=36 // pred_fallthru
          _
        // Predicated region
        $region42: #{combined_model_forward.1} parent=36 // pred_check
          _
        $region43: #{combined_model_forward.1} parent=36 // pred_check_branch
          %811 = sbr.rel (0) target = $region45
        $region44: #{combined_model_forward.1} parent=36 // pred_region
          %s813 = ssub.s32 16, 1
          loop: start=0, step=1, limit=1
          $region46: #{combined_model_forward.1} parent=44 // loop_pre_header
            _
          $region47: #{combined_model_forward.1} parent=44 // loop_header
            %s815 = sphi 0, %s819
            %p816 = scmp.ge.s32.totalorder %s815, 1
            %s820 = sphi [#allocation2], [#allocation2]
            %s821 = sphi %s7, %s7
          $region48: #{combined_model_forward.1} parent=44 // loop_header_branch
            %818 = sbr.rel (%p816) target = $region52
          $region49: #{combined_model_forward.1} parent=44 // loop_body
            %v822 = vld [vmem:[%s820] sm:%s813]
            %823 = vst [vmem:[%s821] sm:%s813] %v822
          $region50: #{combined_model_forward.1} parent=44 // loop_footer
            %s819 = sadd.s32 1, %s815
          $region51: #{combined_model_forward.1} parent=44 // loop_footer_branch
            %814 = sbr.rel target = $region47
          $region52: #{combined_model_forward.1} parent=44 // loop_exit
            _
        $region45: #{combined_model_forward.1} parent=36 // pred_fallthru
          _
      $region37: #{combined_model_forward.1} parent=32 // pred_fallthru
        _
      %838 = vnop
    $region33: #{combined_model_forward.1} parent=1 // pred_fallthru
      _
    // Predicated region
    $region64: #{combined_model_forward.1} parent=1 // pred_check
      _
    $region65: #{combined_model_forward.1} parent=1 // pred_check_branch
      %840 = sbr.rel (0) target = $region67
    $region66: #{combined_model_forward.1} parent=1 // pred_region
      _
    $region67: #{combined_model_forward.1} parent=1 // pred_fallthru
      _

</llo_original>
